<compile_context>
chip_gen: v7x
topology: tpu7x:2x2x1
jax: 0.10.0
libtpu: 0.0.40
codegen_flags: <defaults>
</compile_context>

<pallas_src>
import jax
import jax.numpy as jnp
from jax import lax
from jax.experimental import pallas as pl
from jax.experimental.pallas import tpu as pltpu

_LOG_CLAMP = -100.0                       # matches torch F.binary_cross_entropy clamp
_INPUT_BUFFER_BYTES = 8 * 1024 * 1024     # budget for 2 inputs x 2 pipeline buffers
_MAX_TILE_LANES = 16384


def _round_down(x, m):
    return (x // m) * m


def _round_up(x, m):
    return ((x + m - 1) // m) * m


def _cdiv(a, b):
    return (a + b - 1) // b


def _make_bce_kernel(R, M, tile_r, tile_m, acc_lanes, mask_rows, mask_cols):
    folds = tile_m // acc_lanes

    def kernel(p_ref, t_ref, out_ref, acc_ref):
        i = pl.program_id(0)          # row-chunk axis ("parallel")
        j = pl.program_id(1)          # lane-tile reduction axis ("arbitrary")

        @pl.when(j == 0)
        def _():
            acc_ref[...] = jnp.zeros_like(acc_ref)

        row_valid = None
        if mask_rows:
            rows = i * tile_r + lax.broadcasted_iota(jnp.int32, (tile_r, acc_lanes), 0)
            row_valid = rows < R

        acc = acc_ref[...]
        for k in range(folds):        # static unroll; 128-multiple lane-aligned slices
            sl = slice(k * acc_lanes, (k + 1) * acc_lanes)
            p = p_ref[:, sl].astype(jnp.float32)
            t = t_ref[:, sl].astype(jnp.float32)

            valid = row_valid
            if mask_cols:
                cols = (j * tile_m + k * acc_lanes
                        + lax.broadcasted_iota(jnp.int32, (tile_r, acc_lanes), 1))
                col_valid = cols < M
                valid = col_valid if valid is None else (valid & col_valid)
            if valid is not None:
                # p=1, t=1 contributes exactly 0 BCE (log(0) clamps to -100, times 0).
                p = jnp.where(valid, p, 1.0)
                t = jnp.where(valid, t, 1.0)

            log_p = jnp.maximum(jnp.log(p), _LOG_CLAMP)
            log_1mp = jnp.maximum(jnp.log(1.0 - p), _LOG_CLAMP)
            acc = acc + (-(t * log_p + (1.0 - t) * log_1mp))
        acc_ref[...] = acc

        @pl.when(j == pl.num_programs(1) - 1)
        def _():
            # One XLU sublane-reduce per row chunk -> tiny, lane-dense HBM output.
            out_ref[0] = jnp.sum(acc_ref[...], axis=0, keepdims=True)

    return kernel


def multi_class_bce(inputs, targets):
    """inputs/targets: (N, C, H, W); inputs are probabilities in (0, 1)."""
    N, C, H, W = inputs.shape
    R = N * C                              # row axis (free reshape of contiguous NCHW)
    M = H * W                              # lane-dense reduction axis

    p2 = inputs.reshape(R, M)              # no data movement
    t2 = targets.reshape(R, M)

    itemsize = jnp.dtype(inputs.dtype).itemsize
    elem_budget = _INPUT_BUFFER_BYTES // (4 * itemsize)   # 2 inputs x 2 buffers

    # Lane tile: multiple of 128 (or the full extent when M < 128).
    if M < 128:
        tile_m = M
    else:
        cap = _round_down(max(elem_budget // max(min(R, 8), 1), 128), 128)
        tile_m = max(128, min(_round_down(M, 128), _MAX_TILE_LANES, cap))

    # Row tile: multiple of 8 (or the full extent when R <= 8).
    if R <= 8:
        tile_r = R
    else:
        cap_r = _round_down(max(elem_budget // tile_m, 8), 8)
        tile_r = max(8, min(_round_down(R, 8), cap_r))
        # v7x megacore: ensure the "parallel" axis has >= 2 chunks when possible.
        if tile_r >= R and R >= 16:
            tile_r = max(8, _round_up(_cdiv(R, 2), 8))

    n_r = _cdiv(R, tile_r)
    n_m = _cdiv(M, tile_m)
    mask_rows = (R % tile_r) != 0
    mask_cols = (M % tile_m) != 0

    if tile_m % 512 == 0:
        acc_lanes = 512
    elif tile_m % 256 == 0:
        acc_lanes = 256
    elif tile_m % 128 == 0:
        acc_lanes = 128
    else:
        acc_lanes = tile_m

    kernel = _make_bce_kernel(R, M, tile_r, tile_m, acc_lanes, mask_rows, mask_cols)

    total = R * M
    cost = pl.CostEstimate(
        flops=8 * total,
        transcendentals=2 * total,
        bytes_accessed=2 * total * itemsize + n_r * acc_lanes * 4,
    )

    partials = pl.pallas_call(
        kernel,
        out_shape=jax.ShapeDtypeStruct((n_r, 1, acc_lanes), jnp.float32),
        grid_spec=pltpu.PrefetchScalarGridSpec(
            num_scalar_prefetch=0,
            grid=(n_r, n_m),
            in_specs=[
                pl.BlockSpec((tile_r, tile_m), lambda i, j: (i, j)),
                pl.BlockSpec((tile_r, tile_m), lambda i, j: (i, j)),
            ],
            out_specs=pl.BlockSpec((1, 1, acc_lanes), lambda i, j: (i, 0, 0)),
            scratch_shapes=[pltpu.VMEM((tile_r, acc_lanes), jnp.float32)],
        ),
        compiler_params=pltpu.CompilerParams(
            dimension_semantics=("parallel", "arbitrary"),
            vmem_limit_bytes=32 * 1024 * 1024,
        ),
        cost_estimate=cost,
    )(p2, t2)

    # Masked tail elements contribute exactly zero, so a plain sum is correct.
    return jnp.sum(partials) / jnp.float32(N * H * W)


def _reference(inputs, targets):
    p = inputs.astype(jnp.float32)
    t = targets.astype(jnp.float32)
    log_p = jnp.maximum(jnp.log(p), _LOG_CLAMP)
    log_1mp = jnp.maximum(jnp.log(1.0 - p), _LOG_CLAMP)
    bce = -(t * log_p + (1.0 - t) * log_1mp)
    # per-channel mean over (N, H, W), then sum over channels
    return jnp.sum(jnp.mean(bce, axis=(0, 2, 3)))


if __name__ == "__main__":
    key = jax.random.PRNGKey(0)
    k1, k2, k3, k4 = jax.random.split(key, 4)
    fn = jax.jit(multi_class_bce)

    # Primary small test (aligned shapes).
    N, C, H, W = 2, 4, 16, 16
    inputs = jax.nn.sigmoid(jax.random.normal(k1, (N, C, H, W), jnp.float32))
    targets = (jax.random.uniform(k2, (N, C, H, W)) > 0.5).astype(jnp.float32)
    loss = jax.block_until_ready(fn(inputs, targets))
    ref = jax.block_until_ready(_reference(inputs, targets))
    assert jnp.allclose(loss, ref, rtol=1e-5, atol=1e-5), (loss, ref)

    # Ragged shapes: exercises in-kernel tail masking + multi-step reduction grid.
    N2, C2, H2, W2 = 2, 5, 9, 23
    inputs2 = jax.nn.sigmoid(jax.random.normal(k3, (N2, C2, H2, W2), jnp.float32))
    targets2 = (jax.random.uniform(k4, (N2, C2, H2, W2)) > 0.5).astype(jnp.float32)
    loss2 = jax.block_until_ready(fn(inputs2, targets2))
    ref2 = jax.block_until_ready(_reference(inputs2, targets2))
    assert jnp.allclose(loss2, ref2, rtol=1e-5, atol=1e-5), (loss2, ref2)

    print("KERNEL_OK")
</pallas_src>

<mosaic_0001>
module attributes {stable_mosaic.version = 11 : i64} {
  func.func @kernel(%arg0: i32, %arg1: i32, %arg2: memref<8x256xf32, #tpu.memory_space<vmem>>, %arg3: memref<8x256xf32, #tpu.memory_space<vmem>>, %arg4: memref<1x1x256xf32, #tpu.memory_space<vmem>>, %arg5: memref<8x256xf32, #tpu.memory_space<vmem>>) attributes {dimension_semantics = [#tpu.dimension_semantics<parallel>, #tpu.dimension_semantics<arbitrary>], iteration_bounds = array<i64: 1, 1>, scalar_prefetch = 0 : i64, scratch_operands = 1 : i64, tpu.core_type = #tpu.core_type<tc>, window_params = [{transform_indices = @transform_0, window_bounds = array<i64: 8, 256>}, {transform_indices = @transform_1, window_bounds = array<i64: 8, 256>}, {transform_indices = @transform_2, window_bounds = array<i64: 1, 1, 256>}]} {
    %c0_i32 = arith.constant 0 : i32
    %0 = arith.cmpi eq, %arg1, %c0_i32 : i32
    %1 = arith.extui %0 : i1 to i32
    %c0_i32_0 = arith.constant 0 : i32
    %2 = arith.cmpi ne, %1, %c0_i32_0 : i32
    scf.if %2 {
      %cst_14 = arith.constant 0.000000e+00 : f32
      %26 = vector.broadcast %cst_14 : f32 to vector<8x256xf32>
      %c0_15 = arith.constant 0 : index
      %c0_16 = arith.constant 0 : index
      %27 = vector.load %arg5[%c0_15, %c0_16] : memref<8x256xf32, #tpu.memory_space<vmem>>, vector<8x256xf32>
      tpu.vector_store %arg5[%c0_15, %c0_16], %26 {strides = array<i32>} : memref<8x256xf32, #tpu.memory_space<vmem>>, vector<8x256xf32>,
    } else {
    }
    %c0 = arith.constant 0 : index
    %c0_1 = arith.constant 0 : index
    %3 = vector.load %arg5[%c0, %c0_1] : memref<8x256xf32, #tpu.memory_space<vmem>>, vector<8x256xf32>
    %c0_2 = arith.constant 0 : index
    %c0_3 = arith.constant 0 : index
    %4 = vector.load %arg2[%c0_2, %c0_3] : memref<8x256xf32, #tpu.memory_space<vmem>>, vector<8x256xf32>
    %c0_4 = arith.constant 0 : index
    %c0_5 = arith.constant 0 : index
    %5 = vector.load %arg3[%c0_4, %c0_5] : memref<8x256xf32, #tpu.memory_space<vmem>>, vector<8x256xf32>
    %6 = math.log %4 : vector<8x256xf32>
    %cst = arith.constant -1.000000e+02 : f32
    %7 = vector.broadcast %cst : f32 to vector<8x256xf32>
    %8 = arith.maximumf %6, %7 : vector<8x256xf32>
    %cst_6 = arith.constant 1.000000e+00 : f32
    %9 = vector.broadcast %cst_6 : f32 to vector<8x256xf32>
    %10 = arith.subf %9, %4 : vector<8x256xf32>
    %11 = math.log %10 : vector<8x256xf32>
    %cst_7 = arith.constant -1.000000e+02 : f32
    %12 = vector.broadcast %cst_7 : f32 to vector<8x256xf32>
    %13 = arith.maximumf %11, %12 : vector<8x256xf32>
    %14 = arith.mulf %5, %8 : vector<8x256xf32>
    %cst_8 = arith.constant 1.000000e+00 : f32
    %15 = vector.broadcast %cst_8 : f32 to vector<8x256xf32>
    %16 = arith.subf %15, %5 : vector<8x256xf32>
    %17 = arith.mulf %16, %13 : vector<8x256xf32>
    %18 = arith.addf %14, %17 : vector<8x256xf32>
    %cst_9 = arith.constant 0.000000e+00 : f32
    %19 = vector.broadcast %cst_9 : f32 to vector<8x256xf32>
    %20 = arith.subf %19, %18 : vector<8x256xf32>
    %21 = arith.addf %3, %20 : vector<8x256xf32>
    %c0_10 = arith.constant 0 : index
    %c0_11 = arith.constant 0 : index
    %22 = vector.load %arg5[%c0_10, %c0_11] : memref<8x256xf32, #tpu.memory_space<vmem>>, vector<8x256xf32>
    tpu.vector_store %arg5[%c0_10, %c0_11], %21 {strides = array<i32>} : memref<8x256xf32, #tpu.memory_space<vmem>>, vector<8x256xf32>,
    %c0_i32_12 = arith.constant 0 : i32
    %23 = arith.cmpi eq, %arg1, %c0_i32_12 : i32
    %24 = arith.extui %23 : i1 to i32
    %c0_i32_13 = arith.constant 0 : i32
    %25 = arith.cmpi ne, %24, %c0_i32_13 : i32
    scf.if %25 {
      %c0_14 = arith.constant 0 : index
      %c0_15 = arith.constant 0 : index
      %26 = vector.load %arg5[%c0_14, %c0_15] : memref<8x256xf32, #tpu.memory_space<vmem>>, vector<8x256xf32>
      %cst_16 = arith.constant dense<0.000000e+00> : vector<256xf32>
      %27 = vector.multi_reduction <add>, %26, %cst_16 [0] : vector<8x256xf32> to vector<256xf32>
      %28 = vector.shape_cast %27 : vector<256xf32> to vector<1x256xf32>
      %c0_17 = arith.constant 0 : index
      %c0_18 = arith.constant 0 : index
      %c0_19 = arith.constant 0 : index
      %29 = vector.load %arg4[%c0_17, %c0_18, %c0_19] : memref<1x1x256xf32, #tpu.memory_space<vmem>>, vector<1x1x256xf32>
      %30 = vector.shape_cast %29 : vector<1x1x256xf32> to vector<1x256xf32>
      %31 = vector.shape_cast %28 : vector<1x256xf32> to vector<1x1x256xf32>
      tpu.vector_store %arg4[%c0_17, %c0_18, %c0_19], %31 {strides = array<i32>} : memref<1x1x256xf32, #tpu.memory_space<vmem>>, vector<1x1x256xf32>,
    } else {
    }
    return
  }
  func.func @transform_0(%arg0: i32, %arg1: i32) -> (i32, i32) {
    %c0_i32 = arith.constant 0 : i32
    return %arg0, %arg1 : i32, i32
  }
  func.func @transform_1(%arg0: i32, %arg1: i32) -> (i32, i32) {
    %c0_i32 = arith.constant 0 : i32
    return %arg0, %arg1 : i32, i32
  }
  func.func @transform_2(%arg0: i32, %arg1: i32) -> (i32, i32, i32) {
    %c0_i32 = arith.constant 0 : i32
    %c0_i32_0 = arith.constant 0 : i32
    %c0_i32_1 = arith.constant 0 : i32
    return %arg0, %c0_i32, %c0_i32_0 : i32, i32, i32
  }
}

</mosaic_0001>

<llo_original>
// kernel: multi_class_bce.1
$region0: #{multi_class_bce.1}
  #allocation0 [shape = 'u32[]', space=smem, size = 0x4, offset = 0x4, fixed_abs, tag = 'smem constant byte address 0x4 - core index']
  #allocation1 [shape = 'u32[144,128]{1,0:T(1,128)}', space=vmem, size = 0x12000, scoped, tag = 'internal scratch']
  #allocation2 [shape = 'f32[8,256]{1,0:T(8,128)}', space=vmem, size = 0x2000, scoped, tag = 'scratch operand']
  %s0 = inlined_call_operand.vmem [shape: f32[8,256], index: 0, kind: input, shape index: {}]
  %s1 = inlined_call_operand.vmem [shape: f32[8,256], index: 1, kind: input, shape index: {}]
  %s2 = inlined_call_operand.vmem [shape: f32[1,1,256], index: 2, kind: output, shape index: {}]
  %s3 = sld [smem:[#allocation0]]
  $region26: #{multi_class_bce.1} parent=0
    _
  %s5 = ssub.s32 1, %s3
  %s6 = scalar_select 0, %s5, %s3
  // Predicated region
  $region2: #{multi_class_bce.1} parent=0 // pred_check
    _
  $region3: #{multi_class_bce.1} parent=0 // pred_check_branch
    %8 = sbr.rel (0) target = $region5
  $region4: #{multi_class_bce.1} parent=0 // pred_region
    _
  $region5: #{multi_class_bce.1} parent=0 // pred_fallthru
    _
  // Predicated region
  $region6: #{multi_class_bce.1} parent=0 // pred_check
    _
  $region7: #{multi_class_bce.1} parent=0 // pred_check_branch
    %10 = sbr.rel (0) target = $region9
  $region8: #{multi_class_bce.1} parent=0 // pred_region
    _
  $region9: #{multi_class_bce.1} parent=0 // pred_fallthru
    _
  %p11 = scmp.eq.s32.totalorder 0, 0
  // Predicated region
  $region10: #{multi_class_bce.1} parent=0 // pred_check
    %p12 = pneg %p11
  $region11: #{multi_class_bce.1} parent=0 // pred_check_branch
    %14 = sbr.rel (%p12) target = $region13
  $region12: #{multi_class_bce.1} parent=0 // pred_region
    %15 = vst [vmem:[#allocation2] sm:$0xff] 0.0
    %16 = vst [vmem:[#allocation2 + $0x8] sm:$0xff] 0.0
  $region13: #{multi_class_bce.1} parent=0 // pred_fallthru
    _
  %v17 = vld [vmem:[#allocation2] sm:$0xff]
  %v18 = vld [vmem:[#allocation2 + $0x8] sm:$0xff]
  %v19 = vld [vmem:[%s0] sm:$0xff]
  %v20 = vld [vmem:[%s0 + $0x8] sm:$0xff]
  %v21 = vld [vmem:[%s1] sm:$0xff]
  %v22 = vld [vmem:[%s1 + $0x8] sm:$0xff]
  %v23 = vlog2.pop %v19
  %v24 = vmul.f32 %v23, 0.6931472
  %v25 = vlog2.pop %v20
  %v26 = vmul.f32 %v25, 0.6931472
  %v27 = vmax.f32 %v24, -100.0
  %v28 = vmax.f32 %v26, -100.0
  %v29 = vsub.f32 1.0, %v19
  %v30 = vsub.f32 1.0, %v20
  %v31 = vlog2.pop %v29
  %v32 = vmul.f32 %v31, 0.6931472
  %v33 = vlog2.pop %v30
  %v34 = vmul.f32 %v33, 0.6931472
  %v35 = vmax.f32 %v32, -100.0
  %v36 = vmax.f32 %v34, -100.0
  %v37 = vmul.f32 %v21, %v27
  %v38 = vmul.f32 %v22, %v28
  %v39 = vsub.f32 1.0, %v21
  %v40 = vsub.f32 1.0, %v22
  %v41 = vmul.f32 %v39, %v35
  %v42 = vmul.f32 %v40, %v36
  %v43 = vadd.f32 %v37, %v41
  %v44 = vadd.f32 %v38, %v42
  %v45 = vsub.f32 0.0, %v43
  %v46 = vsub.f32 0.0, %v44
  %v47 = vadd.f32 %v17, %v45
  %v48 = vadd.f32 %v18, %v46
  %49 = vst [vmem:[#allocation2] sm:$0xff] %v47
  %50 = vst [vmem:[#allocation2 + $0x8] sm:$0xff] %v48
  // Predicated region
  $region14: #{multi_class_bce.1} parent=0 // pred_check
    %p51 = pneg %p11
  $region15: #{multi_class_bce.1} parent=0 // pred_check_branch
    %53 = sbr.rel (%p51) target = $region17
  $region16: #{multi_class_bce.1} parent=0 // pred_region
    %v54 = vld [vmem:[#allocation2] sm:$0xff]
    %v55 = vld [vmem:[#allocation2 + $0x8] sm:$0xff]
    %v56 = vrot.slane %v54, 4
    %v57 = vadd.f32 %v54, %v56
    %v58 = vrot.slane %v57, 2
    %v59 = vadd.f32 %v57, %v58
    %v60 = vrot.slane %v59, 1
    %v61 = vadd.f32 %v59, %v60
    %v62 = vrot.slane %v55, 4
    %v63 = vadd.f32 %v55, %v62
    %v64 = vrot.slane %v63, 2
    %v65 = vadd.f32 %v63, %v64
    %v66 = vrot.slane %v65, 1
    %v67 = vadd.f32 %v65, %v66
    %v70 = vcombine.low %v61, %v67
    %v72 = vunpack.c.l.s4 1966171168
    %v73 = vunpack.c.0.s8 %v72
    %v74 = vlaneseq
    %v75 = vshrl.u32 %v74, 7
    %v76 = vsub.s32 %v73, %v75
    %v77 = vrot.slane %v70, %v76
    %v79 = vunpack.c.l.s4 1966171168
    %v80 = vunpack.c.0.s8 %v79
    %v81 = vlaneseq
    %v82 = vshrl.u32 %v81, 7
    %v83 = vsub.s32 %v80, %v82
    %v84 = vrot.slane %v77, %v83
    %v86 = vlaneseq
    %vm87 = vcmp.ge.s32.totalorder %v86, 0
    %vm88 = vcmp.lt.s32.totalorder %v86, 256
    %vm89 = vmand %vm87, %vm88
    %90 = vst.msk [vmem:[%s2] sm:$0x3] %vm89, %v84
  $region17: #{multi_class_bce.1} parent=0 // pred_fallthru
    _
  // Predicated region
  $region18: #{multi_class_bce.1} parent=0 // pred_check
    _
  $region19: #{multi_class_bce.1} parent=0 // pred_check_branch
    %92 = sbr.rel (0) target = $region21
  $region20: #{multi_class_bce.1} parent=0 // pred_region
    _
  $region21: #{multi_class_bce.1} parent=0 // pred_fallthru
    _
  // Predicated region
  $region22: #{multi_class_bce.1} parent=0 // pred_check
    _
  $region23: #{multi_class_bce.1} parent=0 // pred_check_branch
    %94 = sbr.rel (0) target = $region25
  $region24: #{multi_class_bce.1} parent=0 // pred_region
    _
  $region25: #{multi_class_bce.1} parent=0 // pred_fallthru
    _

</llo_original>
